<compile_context>
chip_gen: v6e
topology: v6e:2x2x1
jax: 0.10.0
libtpu: 0.0.40
codegen_flags: <defaults>
</compile_context>

<pallas_src>
import functools

import jax
import jax.numpy as jnp
from jax.experimental import pallas as pl
from jax.experimental.pallas import tpu as pltpu


# ----------------------------------------------------------------------------
# hardware-aware tile sizing
# ----------------------------------------------------------------------------
def _physical_vmem_bytes():
    """Physical VMEM per TensorCore (128 MiB v5e/v6e, 64 MiB v7x)."""
    try:
        return int(pltpu.get_tpu_info().vmem_capacity_bytes)
    except Exception:
        return 64 * 1024 * 1024  # conservative fallback (v7x-sized)


def _vmem_limit_bytes():
    return int(min(_physical_vmem_bytes() * 3 // 4, 96 * 1024 * 1024))


def _round_down(x, m):
    return max(m, (x // m) * m)


def _rowwise_tile_rows(n_rows, d, in_bytes_per_elem):
    """Largest row tile whose double-buffered inputs + f32 temps fit ~VMEM/4.
    No forced grid-step minimum: on single-TC v5e/v6e extra steps only add the
    ~0.35 us per-step overhead to an HBM-bound kernel."""
    if n_rows <= 8:
        return n_rows  # single full-array block
    budget = _physical_vmem_bytes() // 4
    per_row = 2 * in_bytes_per_elem * d + 8 * d  # 2x pipelined inputs + f32 temps
    tr = budget // max(per_row, 1)
    tr = _round_down(min(int(tr), 2048), 8)       # big-tile sweet spot
    if tr >= n_rows:
        return n_rows                             # one full block (block == dim is legal)
    return tr


def _pairwise_tiles(b, bp, d, x_isize, y_isize, o_isize):
    """(TM, TN, TK).  Keep full MXU-sized TM/TN and split the feature dim (K)
    when full-D rows would not fit VMEM (matters on v7x's 64 MiB)."""
    budget = _physical_vmem_bytes() // 2
    tm = b if b < 8 else min(256, _round_down(b, 8))
    tn = bp if bp < 128 else min(256, _round_down(bp, 128))
    # output double-buffer + f32 accumulator + (padded) norm scratch
    fixed = 2 * tm * tn * o_isize + tm * tn * 4 + (tm + tn) * 4 * 128
    per_k = 2 * (tm * x_isize + tn * y_isize)     # double-buffered input columns
    tk_max = max(128, (budget - fixed) // max(per_k, 1))
    if d <= tk_max or d % 128 != 0:
        return tm, tn, d                          # single K step (no ragged-K padding)
    tk = 128
    for cand in range(_round_down(min(tk_max, d), 128), 0, -128):
        if d % cand == 0:                         # TK must divide D exactly
            tk = cand
            break
    return tm, tn, tk


# ----------------------------------------------------------------------------
# kernels
# ----------------------------------------------------------------------------
def _rowwise_cos_kernel(x_ref, y_ref, o_ref, *, inv_temp, eps2):
    # Works for 2-D tiles (TR, D) -> (TR, 1) and for 3-D broadcast tiles
    # (1, {1|TB}, D) -> (1, TB, 1); broadcasting happens inside the tile.
    x = x_ref[...].astype(jnp.float32)
    y = y_ref[...].astype(jnp.float32)
    dot = jnp.sum(x * y, axis=-1, keepdims=True)
    sx = jnp.sum(x * x, axis=-1, keepdims=True)
    sy = jnp.sum(y * y, axis=-1, keepdims=True)
    # torch clamps the *product* of squared norms by eps^2 before the sqrt.
    inv_den = jax.lax.rsqrt(jnp.maximum(sx * sy, eps2))   # EUP rsqrt, no divides
    o_ref[...] = (dot * inv_den * inv_temp).astype(o_ref.dtype)


def _pairwise_cos_kernel(x_ref, y_ref, o_ref, acc_ref, sx_ref, sy_ref, *,
                         inv_temp, eps2):
    # x_ref: (TM, TK), y_ref: (TN, TK) in storage dtype; o_ref: (TM, TN).
    k = pl.program_id(2)

    @pl.when(k == 0)
    def _():
        acc_ref[...] = jnp.zeros_like(acc_ref)
        sx_ref[...] = jnp.zeros_like(sx_ref)
        sy_ref[...] = jnp.zeros_like(sy_ref)

    x = x_ref[...]
    y = y_ref[...]
    if not jnp.issubdtype(x.dtype, jnp.floating):
        x = x.astype(jnp.float32)
    if not jnp.issubdtype(y.dtype, jnp.floating):
        y = y.astype(jnp.float32)
    if x.dtype != y.dtype:
        ct = jnp.promote_types(x.dtype, y.dtype)
        x = x.astype(ct)
        y = y.astype(ct)

    # Raw x @ y^T on the MXU at default (single-pass) precision, f32 accumulate.
    acc_ref[...] += jax.lax.dot_general(
        x, y, (((1,), (1,)), ((), ())), preferred_element_type=jnp.float32)

    xf = x.astype(jnp.float32)
    yf = y.astype(jnp.float32)
    sx_ref[...] += jnp.sum(xf * xf, axis=-1, keepdims=True)   # (TM, 1)
    sy_ref[...] += jnp.sum(yf * yf, axis=-1, keepdims=True)   # (TN, 1)

    @pl.when(k == pl.num_programs(2) - 1)
    def _():
        # Outer product sx_i * sy_j via a tiny K=1 matmul (avoids a
        # (TN,1)->(1,TN) relayout); HIGHEST on this K=1 op is negligible and
        # keeps ~f32 accuracy for the norm product.
        den2 = jax.lax.dot_general(
            sx_ref[...], sy_ref[...], (((1,), (1,)), ((), ())),
            preferred_element_type=jnp.float32,
            precision=jax.lax.Precision.HIGHEST)
        den2 = jnp.maximum(den2, eps2)            # torch product-clamp semantics
        o_ref[...] = (acc_ref[...] * jax.lax.rsqrt(den2) * inv_temp
                      ).astype(o_ref.dtype)


# ----------------------------------------------------------------------------
# pallas_call wrappers
# ----------------------------------------------------------------------------
def _rowwise_cosine(x2d, y2d, temp, eps, out_dtype):
    r, d = x2d.shape
    tr = _rowwise_tile_rows(r, d, x2d.dtype.itemsize + y2d.dtype.itemsize)
    kernel = functools.partial(_rowwise_cos_kernel,
                               inv_temp=1.0 / float(temp),
                               eps2=float(eps) ** 2)
    out = pl.pallas_call(
        kernel,
        out_shape=jax.ShapeDtypeStruct((r, 1), out_dtype),
        grid_spec=pltpu.PrefetchScalarGridSpec(
            num_scalar_prefetch=0,
            grid=(pl.cdiv(r, tr),),
            in_specs=[pl.BlockSpec((tr, d), lambda i: (i, 0)),
                      pl.BlockSpec((tr, d), lambda i: (i, 0))],
            out_specs=pl.BlockSpec((tr, 1), lambda i: (i, 0)),
        ),
        compiler_params=pltpu.CompilerParams(
            dimension_semantics=("parallel",),
            vmem_limit_bytes=_vmem_limit_bytes()),
    )(x2d, y2d)
    return out[:, 0]


def _bcast3d_cosine(x3, y3, temp, eps, out_dtype):
    """3-D inputs broadcast along dim0 and/or dim1 (e.g. x:(A,1,D), y:(A,B,D)).
    The broadcast operand is NOT materialized: its index_map pins the block."""
    ax, bx, d = x3.shape
    ay, by, _ = y3.shape
    a, b = max(ax, ay), max(bx, by)
    tb = _rowwise_tile_rows(b, d, x3.dtype.itemsize + y3.dtype.itemsize)
    xb = tb if bx > 1 else 1
    yb = tb if by > 1 else 1
    x_map = lambda i, j: (i if ax > 1 else 0, j if bx > 1 else 0, 0)
    y_map = lambda i, j: (i if ay > 1 else 0, j if by > 1 else 0, 0)
    kernel = functools.partial(_rowwise_cos_kernel,
                               inv_temp=1.0 / float(temp),
                               eps2=float(eps) ** 2)
    out = pl.pallas_call(
        kernel,
        out_shape=jax.ShapeDtypeStruct((a, b, 1), out_dtype),
        grid_spec=pltpu.PrefetchScalarGridSpec(
            num_scalar_prefetch=0,
            grid=(a, pl.cdiv(b, tb)),
            in_specs=[pl.BlockSpec((1, xb, d), x_map),
                      pl.BlockSpec((1, yb, d), y_map)],
            out_specs=pl.BlockSpec((1, tb, 1), lambda i, j: (i, j, 0)),
        ),
        compiler_params=pltpu.CompilerParams(
            dimension_semantics=("parallel", "parallel"),
            vmem_limit_bytes=_vmem_limit_bytes()),
    )(x3, y3)
    return out[..., 0]


def _pairwise_cosine(x2d, y2d, temp, eps, out_dtype):
    b, d = x2d.shape
    bp = y2d.shape[0]
    tm, tn, tk = _pairwise_tiles(b, bp, d,
                                 x2d.dtype.itemsize, y2d.dtype.itemsize,
                                 jnp.dtype(out_dtype).itemsize)
    kernel = functools.partial(_pairwise_cos_kernel,
                               inv_temp=1.0 / float(temp),
                               eps2=float(eps) ** 2)
    return pl.pallas_call(
        kernel,
        out_shape=jax.ShapeDtypeStruct((b, bp), out_dtype),
        grid_spec=pltpu.PrefetchScalarGridSpec(
            num_scalar_prefetch=0,
            grid=(pl.cdiv(b, tm), pl.cdiv(bp, tn), pl.cdiv(d, tk)),
            in_specs=[pl.BlockSpec((tm, tk), lambda i, j, k: (i, k)),
                      pl.BlockSpec((tn, tk), lambda i, j, k: (j, k))],
            out_specs=pl.BlockSpec((tm, tn), lambda i, j, k: (i, j)),
            scratch_shapes=[pltpu.VMEM((tm, tn), jnp.float32),
                            pltpu.VMEM((tm, 1), jnp.float32),
                            pltpu.VMEM((tn, 1), jnp.float32)],
        ),
        compiler_params=pltpu.CompilerParams(
            dimension_semantics=("parallel", "parallel", "arbitrary"),
            vmem_limit_bytes=_vmem_limit_bytes()),
    )(x2d, y2d)


# ----------------------------------------------------------------------------
# public entry point (== Similarity.forward)
# ----------------------------------------------------------------------------
def similarity(x, y, temp=0.07, eps=1e-8):
    """cosine_similarity(x, y, dim=-1) / temp with torch broadcasting rules."""
    x = jnp.asarray(x)
    y = jnp.asarray(y)
    if x.shape[-1] != y.shape[-1]:
        raise ValueError(f"feature dims must match: {x.shape} vs {y.shape}")
    d = x.shape[-1]
    out_dtype = jnp.promote_types(x.dtype, y.dtype)
    if not jnp.issubdtype(out_dtype, jnp.floating):
        out_dtype = jnp.float32
    bshape = jnp.broadcast_shapes(x.shape[:-1], y.shape[:-1])

    # Path 1 (MXU): SimCSE pairwise pattern  x:(B,1,D), y:(1,B',D) -> (B,B').
    if x.ndim == 3 and y.ndim == 3 and x.shape[1] == 1 and y.shape[0] == 1:
        out = _pairwise_cosine(x[:, 0, :], y[0], temp, eps, out_dtype)
        return out.reshape(bshape)

    # Path 2 (VPU row-wise): identical shapes -> flatten, zero copies.
    if x.shape == y.shape:
        out = _rowwise_cosine(x.reshape(-1, d), y.reshape(-1, d),
                              temp, eps, out_dtype)
        return out.reshape(bshape)

    # Path 3 (VPU, broadcast via index_map pinning): 3-D single/double-axis
    # broadcast, no HBM materialization of the broadcast operand.
    if x.ndim == 3 and y.ndim == 3:
        out = _bcast3d_cosine(x, y, temp, eps, out_dtype)
        return out.reshape(bshape)

    # Path 4: any other broadcast pattern (rare) -- materialize the broadcast.
    xb = jnp.broadcast_to(x, bshape + (d,)).reshape(-1, d)
    yb = jnp.broadcast_to(y, bshape + (d,)).reshape(-1, d)
    out = _rowwise_cosine(xb, yb, temp, eps, out_dtype)
    return out.reshape(bshape)


# ----------------------------------------------------------------------------
# reference + self-test
# ----------------------------------------------------------------------------
def _reference(x, y, temp=0.07, eps=1e-8):
    x = jnp.asarray(x, dtype=jnp.float32)
    y = jnp.asarray(y, dtype=jnp.float32)
    x, y = jnp.broadcast_arrays(x, y)
    dot = jnp.sum(x * y, axis=-1)
    sx = jnp.sum(x * x, axis=-1)
    sy = jnp.sum(y * y, axis=-1)
    return dot * jax.lax.rsqrt(jnp.maximum(sx * sy, eps * eps)) / temp


if __name__ == "__main__":
    key = jax.random.PRNGKey(0)
    kx, ky, ka, kb = jax.random.split(key, 4)
    temp = 0.07

    # 1) SimCSE-style pairwise: x (B,1,D) vs y (1,B',D) -> (B,B')  [MXU path]
    B, Bp, D = 2, 4, 32
    x = jax.random.normal(kx, (B, 1, D), dtype=jnp.float32)
    y = jax.random.normal(ky, (1, Bp, D), dtype=jnp.float32)
    out1 = jax.block_until_ready(similarity(x, y, temp=temp))
    ref1 = _reference(x, y, temp=temp)
    assert out1.shape == (B, Bp), out1.shape
    # MXU now runs at default (bf16 single-pass) precision -> looser tolerance.
    assert jnp.allclose(out1, ref1, rtol=5e-2, atol=5e-2), (out1, ref1)

    # 2) elementwise use (same shapes): (batch, seq, D) pairs  [row-wise path]
    a = jax.random.normal(ka, (2, 8, 32), dtype=jnp.float32)
    b = jax.random.normal(kb, (2, 8, 32), dtype=jnp.float32)
    out2 = jax.block_until_ready(similarity(a, b, temp=temp))
    ref2 = _reference(a, b, temp=temp)
    assert out2.shape == (2, 8), out2.shape
    assert jnp.allclose(out2, ref2, rtol=1e-4, atol=1e-4), (out2, ref2)

    # 3) single-axis broadcast: x (B,1,D) vs y (B,B',D)  [index-map pinned path]
    y3 = jax.random.normal(ky, (B, Bp, D), dtype=jnp.float32)
    out3 = jax.block_until_ready(similarity(x, y3, temp=temp))
    ref3 = _reference(x, y3, temp=temp)
    assert out3.shape == (B, Bp), out3.shape
    assert jnp.allclose(out3, ref3, rtol=1e-4, atol=1e-4), (out3, ref3)

    print("KERNEL_OK")
</pallas_src>

<mosaic_0001>
module attributes {stable_mosaic.version = 11 : i64} {
  func.func @_pairwise_cos_kernel(%arg0: i32, %arg1: i32, %arg2: i32, %arg3: memref<2x32xf32, #tpu.memory_space<vmem>>, %arg4: memref<4x32xf32, #tpu.memory_space<vmem>>, %arg5: memref<2x4xf32, #tpu.memory_space<vmem>>, %arg6: memref<2x4xf32, #tpu.memory_space<vmem>>, %arg7: memref<2x1xf32, #tpu.memory_space<vmem>>, %arg8: memref<4x1xf32, #tpu.memory_space<vmem>>) attributes {dimension_semantics = [#tpu.dimension_semantics<parallel>, #tpu.dimension_semantics<parallel>, #tpu.dimension_semantics<arbitrary>], iteration_bounds = array<i64: 1, 1, 1>, scalar_prefetch = 0 : i64, scratch_operands = 3 : i64, tpu.core_type = #tpu.core_type<tc>, window_params = [{transform_indices = @transform_0, window_bounds = array<i64: 2, 32>}, {transform_indices = @transform_1, window_bounds = array<i64: 4, 32>}, {transform_indices = @transform_2, window_bounds = array<i64: 2, 4>}]} {
    %c0_i32 = arith.constant 0 : i32
    %0 = arith.cmpi eq, %arg2, %c0_i32 : i32
    %1 = arith.extui %0 : i1 to i32
    %c0_i32_0 = arith.constant 0 : i32
    %2 = arith.cmpi ne, %1, %c0_i32_0 : i32
    scf.if %2 {
      %cst_20 = arith.constant 0.000000e+00 : f32
      %24 = vector.broadcast %cst_20 : f32 to vector<2x4xf32>
      %c0_21 = arith.constant 0 : index
      %c0_22 = arith.constant 0 : index
      %25 = vector.load %arg6[%c0_21, %c0_22] : memref<2x4xf32, #tpu.memory_space<vmem>>, vector<2x4xf32>
      tpu.vector_store %arg6[%c0_21, %c0_22], %24 {strides = array<i32>} : memref<2x4xf32, #tpu.memory_space<vmem>>, vector<2x4xf32>,
      %cst_23 = arith.constant 0.000000e+00 : f32
      %26 = vector.broadcast %cst_23 : f32 to vector<2x1xf32>
      %c0_24 = arith.constant 0 : index
      %c0_25 = arith.constant 0 : index
      %27 = vector.load %arg7[%c0_24, %c0_25] : memref<2x1xf32, #tpu.memory_space<vmem>>, vector<2x1xf32>
      tpu.vector_store %arg7[%c0_24, %c0_25], %26 {strides = array<i32>} : memref<2x1xf32, #tpu.memory_space<vmem>>, vector<2x1xf32>,
      %cst_26 = arith.constant 0.000000e+00 : f32
      %28 = vector.broadcast %cst_26 : f32 to vector<4x1xf32>
      %c0_27 = arith.constant 0 : index
      %c0_28 = arith.constant 0 : index
      %29 = vector.load %arg8[%c0_27, %c0_28] : memref<4x1xf32, #tpu.memory_space<vmem>>, vector<4x1xf32>
      tpu.vector_store %arg8[%c0_27, %c0_28], %28 {strides = array<i32>} : memref<4x1xf32, #tpu.memory_space<vmem>>, vector<4x1xf32>,
    } else {
    }
    %c0 = arith.constant 0 : index
    %c0_1 = arith.constant 0 : index
    %3 = vector.load %arg3[%c0, %c0_1] : memref<2x32xf32, #tpu.memory_space<vmem>>, vector<2x32xf32>
    %c0_2 = arith.constant 0 : index
    %c0_3 = arith.constant 0 : index
    %4 = vector.load %arg4[%c0_2, %c0_3] : memref<4x32xf32, #tpu.memory_space<vmem>>, vector<4x32xf32>
    %c0_4 = arith.constant 0 : index
    %c0_5 = arith.constant 0 : index
    %5 = vector.load %arg6[%c0_4, %c0_5] : memref<2x4xf32, #tpu.memory_space<vmem>>, vector<2x4xf32>
    %cst = arith.constant dense<0.000000e+00> : vector<2x4xf32>
    %6 = tpu.matmul %3, %4, %cst {dimension_numbers = #tpu.dot_dimension_numbers<[1], [1], [0], [0], [0, 0, 1, 0], [], []>} : vector<2x32xf32>, vector<4x32xf32>, vector<2x4xf32> -> vector<2x4xf32>
    %7 = arith.addf %5, %6 : vector<2x4xf32>
    %c0_6 = arith.constant 0 : index
    %c0_7 = arith.constant 0 : index
    %8 = vector.load %arg6[%c0_6, %c0_7] : memref<2x4xf32, #tpu.memory_space<vmem>>, vector<2x4xf32>
    tpu.vector_store %arg6[%c0_6, %c0_7], %7 {strides = array<i32>} : memref<2x4xf32, #tpu.memory_space<vmem>>, vector<2x4xf32>,
    %c0_8 = arith.constant 0 : index
    %c0_9 = arith.constant 0 : index
    %9 = vector.load %arg7[%c0_8, %c0_9] : memref<2x1xf32, #tpu.memory_space<vmem>>, vector<2x1xf32>
    %10 = arith.mulf %3, %3 : vector<2x32xf32>
    %cst_10 = arith.constant dense<0.000000e+00> : vector<2xf32>
    %11 = vector.multi_reduction <add>, %10, %cst_10 [1] : vector<2x32xf32> to vector<2xf32>
    %12 = vector.shape_cast %11 : vector<2xf32> to vector<2x1xf32>
    %13 = arith.addf %9, %12 : vector<2x1xf32>
    %c0_11 = arith.constant 0 : index
    %c0_12 = arith.constant 0 : index
    %14 = vector.load %arg7[%c0_11, %c0_12] : memref<2x1xf32, #tpu.memory_space<vmem>>, vector<2x1xf32>
    tpu.vector_store %arg7[%c0_11, %c0_12], %13 {strides = array<i32>} : memref<2x1xf32, #tpu.memory_space<vmem>>, vector<2x1xf32>,
    %c0_13 = arith.constant 0 : index
    %c0_14 = arith.constant 0 : index
    %15 = vector.load %arg8[%c0_13, %c0_14] : memref<4x1xf32, #tpu.memory_space<vmem>>, vector<4x1xf32>
    %16 = arith.mulf %4, %4 : vector<4x32xf32>
    %cst_15 = arith.constant dense<0.000000e+00> : vector<4xf32>
    %17 = vector.multi_reduction <add>, %16, %cst_15 [1] : vector<4x32xf32> to vector<4xf32>
    %18 = vector.shape_cast %17 : vector<4xf32> to vector<4x1xf32>
    %19 = arith.addf %15, %18 : vector<4x1xf32>
    %c0_16 = arith.constant 0 : index
    %c0_17 = arith.constant 0 : index
    %20 = vector.load %arg8[%c0_16, %c0_17] : memref<4x1xf32, #tpu.memory_space<vmem>>, vector<4x1xf32>
    tpu.vector_store %arg8[%c0_16, %c0_17], %19 {strides = array<i32>} : memref<4x1xf32, #tpu.memory_space<vmem>>, vector<4x1xf32>,
    %c0_i32_18 = arith.constant 0 : i32
    %21 = arith.cmpi eq, %arg2, %c0_i32_18 : i32
    %22 = arith.extui %21 : i1 to i32
    %c0_i32_19 = arith.constant 0 : i32
    %23 = arith.cmpi ne, %22, %c0_i32_19 : i32
    scf.if %23 {
      %c0_20 = arith.constant 0 : index
      %c0_21 = arith.constant 0 : index
      %24 = vector.load %arg7[%c0_20, %c0_21] : memref<2x1xf32, #tpu.memory_space<vmem>>, vector<2x1xf32>
      %c0_22 = arith.constant 0 : index
      %c0_23 = arith.constant 0 : index
      %25 = vector.load %arg8[%c0_22, %c0_23] : memref<4x1xf32, #tpu.memory_space<vmem>>, vector<4x1xf32>
      %cst_24 = arith.constant dense<0.000000e+00> : vector<2x4xf32>
      %26 = tpu.matmul %24, %25, %cst_24 {dimension_numbers = #tpu.dot_dimension_numbers<[1], [1], [0], [0], [0, 0, 1, 0], [], []>, precision = #tpu.contract_precision<fp32>} : vector<2x1xf32>, vector<4x1xf32>, vector<2x4xf32> -> vector<2x4xf32>
      %cst_25 = arith.constant 1.000000e-16 : f32
      %27 = vector.broadcast %cst_25 : f32 to vector<2x4xf32>
      %28 = arith.maximumf %26, %27 : vector<2x4xf32>
      %c0_26 = arith.constant 0 : index
      %c0_27 = arith.constant 0 : index
      %29 = vector.load %arg6[%c0_26, %c0_27] : memref<2x4xf32, #tpu.memory_space<vmem>>, vector<2x4xf32>
      %30 = math.rsqrt %28 : vector<2x4xf32>
      %31 = arith.mulf %29, %30 : vector<2x4xf32>
      %cst_28 = arith.constant 14.2857141 : f32
      %32 = vector.broadcast %cst_28 : f32 to vector<2x4xf32>
      %33 = arith.mulf %31, %32 : vector<2x4xf32>
      %c0_29 = arith.constant 0 : index
      %c0_30 = arith.constant 0 : index
      %34 = vector.load %arg5[%c0_29, %c0_30] : memref<2x4xf32, #tpu.memory_space<vmem>>, vector<2x4xf32>
      tpu.vector_store %arg5[%c0_29, %c0_30], %33 {strides = array<i32>} : memref<2x4xf32, #tpu.memory_space<vmem>>, vector<2x4xf32>,
    } else {
    }
    return
  }
  func.func @transform_0(%arg0: i32, %arg1: i32, %arg2: i32) -> (i32, i32) {
    %c0_i32 = arith.constant 0 : i32
    return %arg0, %arg2 : i32, i32
  }
  func.func @transform_1(%arg0: i32, %arg1: i32, %arg2: i32) -> (i32, i32) {
    %c0_i32 = arith.constant 0 : i32
    return %arg1, %arg2 : i32, i32
  }
  func.func @transform_2(%arg0: i32, %arg1: i32, %arg2: i32) -> (i32, i32) {
    %c0_i32 = arith.constant 0 : i32
    return %arg0, %arg1 : i32, i32
  }
}

</mosaic_0001>

<llo_original>
// kernel: tpu_custom_call.1
$region0: #{tpu_custom_call.1}
  #allocation0 [shape = 'u32[]', space=smem, size = 0x4, offset = 0x4, fixed_abs, tag = 'smem constant byte address 0x4 - core index']
  #allocation1 [shape = 'u32[144,128]{1,0:T(1,128)}', space=vmem, size = 0x12000, scoped, tag = 'internal scratch']
  #allocation2 [shape = 'f32[2,4]{1,0:T(2,128)}', space=vmem, size = 0x400, scoped, tag = 'scratch operand']
  #allocation3 [shape = 'f32[2,1]{1,0:T(2,128)}', space=vmem, size = 0x400, scoped, tag = 'scratch operand']
  #allocation4 [shape = 'f32[4,1]{1,0:T(4,128)}', space=vmem, size = 0x800, scoped, tag = 'scratch operand']
  %s0 = inlined_call_operand.hbm [shape: f32[2,32], index: 0, kind: input, shape index: {}]
  %s1 = inlined_call_operand.hbm [shape: f32[4,32], index: 1, kind: input, shape index: {}]
  %s2 = inlined_call_operand.hbm [shape: f32[2,4], index: 2, kind: output, shape index: {}]
  %s3 = sld [smem:[#allocation0]]
  $region34: #{tpu_custom_call.1} parent=0
    _
  %s5 = ssub.s32 1, %s3
  %s6 = scalar_select 0, %s5, %s3
  $region1: #{tpu_custom_call.1} parent=0
    #allocation5 [shape = 'u8[1024]{0}', space=vmem, size = 0x400, scoped, tag = 'input window, operand 0, single buffered']
    #allocation6 [shape = 's32[1]{0}', space=sflag, size = 0x4, scoped, tag = 'scoped memory for tpu_custom_call.1']
    #allocation7 [shape = 's32[1]{0}', space=sflag, size = 0x4, scoped, tag = 'scoped memory for tpu_custom_call.1']
    #allocation8 [shape = 'u8[2048]{0}', space=vmem, size = 0x800, scoped, tag = 'input window, operand 1, single buffered']
    #allocation9 [shape = 's32[1]{0}', space=sflag, size = 0x4, scoped, tag = 'scoped memory for tpu_custom_call.1']
    #allocation10 [shape = 'u8[1024]{0}', space=vmem, size = 0x400, scoped, tag = 'output window, operand 0, single buffered']
    %7 = vsyncpa [#allocation6], 0
    %8 = vsyncpa [#allocation9], 0
    %9 = vsyncpa [#allocation7], 0
    // Predicated region
    $region2: #{tpu_custom_call.1} parent=1 // pred_check
      _
    $region3: #{tpu_custom_call.1} parent=1 // pred_check_branch
      %11 = sbr.rel (0) target = $region5
    $region4: #{tpu_custom_call.1} parent=1 // pred_region
      %s13 = ssub.s32 32, 32
      %14 = vsyncadd [#allocation6], %s13
      %s16 = sshll.u32 [#allocation5], 4
      %s17 = int_to_ptr.vmem [resolvable:$true] %s16
      %19 = dma.hbm_to_vmem [thread:$0]  %s0, 32, %s17, [#allocation6]
    $region5: #{tpu_custom_call.1} parent=1 // pred_fallthru
      _
    // Predicated region
    $region6: #{tpu_custom_call.1} parent=1 // pred_check
      _
    $region7: #{tpu_custom_call.1} parent=1 // pred_check_branch
      %21 = sbr.rel (0) target = $region9
    $region8: #{tpu_custom_call.1} parent=1 // pred_region
      %s23 = ssub.s32 64, 64
      %24 = vsyncadd [#allocation9], %s23
      %s26 = sshll.u32 [#allocation8], 4
      %s27 = int_to_ptr.vmem [resolvable:$true] %s26
      %29 = dma.hbm_to_vmem [thread:$0]  %s1, 64, %s27, [#allocation9]
    $region9: #{tpu_custom_call.1} parent=1 // pred_fallthru
      _
    // Predicated region
    $region10: #{tpu_custom_call.1} parent=1 // pred_check
      _
    $region11: #{tpu_custom_call.1} parent=1 // pred_check_branch
      %31 = sbr.rel (0) target = $region13
    $region12: #{tpu_custom_call.1} parent=1 // pred_region
      %32 = dma.done [#allocation6], 32
    $region13: #{tpu_custom_call.1} parent=1 // pred_fallthru
      _
    // Predicated region
    $region14: #{tpu_custom_call.1} parent=1 // pred_check
      _
    $region15: #{tpu_custom_call.1} parent=1 // pred_check_branch
      %34 = sbr.rel (0) target = $region17
    $region16: #{tpu_custom_call.1} parent=1 // pred_region
      %35 = dma.done [#allocation9], 64
    $region17: #{tpu_custom_call.1} parent=1 // pred_fallthru
      _
    %p36 = scmp.eq.s32.totalorder 0, 0
    // Predicated region
    $region18: #{tpu_custom_call.1} parent=1 // pred_check
      %p37 = pneg %p36
    $region19: #{tpu_custom_call.1} parent=1 // pred_check_branch
      %39 = sbr.rel (%p37) target = $region21
    $region20: #{tpu_custom_call.1} parent=1 // pred_region
      %vm40 = vcmask 25600
      %41 = vst.msk [vmem:[#allocation2] sm:$0x3] %vm40, 0.0
      %vm42 = vcmask 1024
      %43 = vst.msk [vmem:[#allocation3] sm:$0x3] %vm42, 0.0
      %vm44 = vcmask 3072
      %45 = vst.msk [vmem:[#allocation4] sm:$0xf] %vm44, 0.0
    $region21: #{tpu_custom_call.1} parent=1 // pred_fallthru
      _
    %v46 = vld [vmem:[#allocation5] sm:$0x3]
    %v47 = vld [vmem:[#allocation8] sm:$0xf]
    %v48 = vld [vmem:[#allocation2] sm:$0x3]
    %vm49 = vcmask 261120
    %v51 = vsel %vm49, %v46, 0
    %v54 = vsel %vm49, %v47, 0
    %56 = vmatprep.subr.mxu0 0.0
    %57 = vmatpush1.xpose.msra.mxu0 0.0
    %58 = vmatprep.subr.mxu0 0.0
    %59 = vmatpush1.xpose.msra.mxu0 0.0
    %60 = vmatprep.subr.mxu0 0.0
    %61 = vmatpush1.xpose.msra.mxu0 0.0
    %62 = vmatprep.subr.mxu0 0.0
    %63 = vmatpush1.xpose.msra.mxu0 0.0
    %64 = vmatprep.subr.mxu0 0.0
    %65 = vmatpush1.xpose.msra.mxu0 0.0
    %66 = vmatprep.subr.mxu0 0.0
    %67 = vmatpush1.xpose.msra.mxu0 0.0
    %68 = vmatprep.subr.mxu0 0.0
    %69 = vmatpush1.xpose.msra.mxu0 0.0
    %70 = vmatprep.subr.mxu0 0.0
    %71 = vmatpush1.xpose.msra.mxu0 0.0
    %72 = vmatprep.subr.mxu0 0.0
    %73 = vmatpush1.xpose.msra.mxu0 0.0
    %74 = vmatprep.subr.mxu0 0.0
    %75 = vmatpush1.xpose.msra.mxu0 0.0
    %76 = vmatprep.subr.mxu0 0.0
    %77 = vmatpush1.xpose.msra.mxu0 0.0
    %78 = vmatprep.subr.mxu0 0.0
    %79 = vmatpush1.xpose.msra.mxu0 0.0
    %80 = vmatprep.subr.mxu0 0.0
    %81 = vmatpush1.xpose.msra.mxu0 0.0
    %82 = vmatprep.subr.mxu0 0.0
    %83 = vmatpush1.xpose.msra.mxu0 0.0
    %84 = vmatprep.subr.mxu0 0.0
    %85 = vmatpush1.xpose.msra.mxu0 0.0
    %86 = vmatprep.subr.mxu0 0.0
    %87 = vmatpush1.xpose.msra.mxu0 %v54
    %88 = vmatprep.subr.mxu0 0.0
    %89 = vmatpush2.xpose.msra.mxu0 0.0
    %90 = vmatprep.subr.mxu0 0.0
    %91 = vmatpush2.xpose.msra.mxu0 0.0
    %92 = vmatprep.subr.mxu0 0.0
    %93 = vmatpush2.xpose.msra.mxu0 0.0
    %94 = vmatprep.subr.mxu0 0.0
    %95 = vmatpush2.xpose.msra.mxu0 0.0
    %96 = vmatprep.subr.mxu0 0.0
    %97 = vmatpush2.xpose.msra.mxu0 0.0
    %98 = vmatprep.subr.mxu0 0.0
    %99 = vmatpush2.xpose.msra.mxu0 0.0
    %100 = vmatprep.subr.mxu0 0.0
    %101 = vmatpush2.xpose.msra.mxu0 0.0
    %102 = vmatprep.subr.mxu0 0.0
    %103 = vmatpush2.xpose.msra.mxu0 0.0
    %104 = vmatprep.subr.mxu0 0.0
    %105 = vmatpush2.xpose.msra.mxu0 0.0
    %106 = vmatprep.subr.mxu0 0.0
    %107 = vmatpush2.xpose.msra.mxu0 0.0
    %108 = vmatprep.subr.mxu0 0.0
    %109 = vmatpush2.xpose.msra.mxu0 0.0
    %110 = vmatprep.subr.mxu0 0.0
    %111 = vmatpush2.xpose.msra.mxu0 0.0
    %112 = vmatprep.subr.mxu0 0.0
    %113 = vmatpush2.xpose.msra.mxu0 0.0
    %114 = vmatprep.subr.mxu0 0.0
    %115 = vmatpush2.xpose.msra.mxu0 0.0
    %116 = vmatprep.subr.mxu0 0.0
    %117 = vmatpush2.xpose.msra.mxu0 0.0
    %118 = vmatprep.subr.mxu0 0.0
    %119 = vmatpush2.xpose.msra.mxu0 0.0
    %120 = vmatprep.mubr.f32.mxu0 0.0
    %121 = vmatmul.mubr.f32.gmra.mxu0 %v51
    %v122 = vpop.f32.mrf.mxu0
    %v123 = vadd.f32 0.0, %v122
    %v124 = vpop.f32.mrf.mxu0
    %125 = vdwg.mxu0
    %v126 = vadd.f32 %v48, %v123
    %vm127 = vcmask 25600
    %128 = vst.msk [vmem:[#allocation2] sm:$0x3] %vm127, %v126
    %v129 = vld [vmem:[#allocation3] sm:$0x3]
    %v130 = vmul.f32 %v46, %v46
    %vm131 = vcmask 254976
    %v132 = vsel %vm131, %v130, 0.0
    %133 = vadd.xlane.f32.xlu0 %v132
    %v134 = vpop.xlane.xlu0 %133
    %v135 = vadd.f32 %v129, %v134
    %vm136 = vcmask 1024
    %137 = vst.msk [vmem:[#allocation3] sm:$0x3] %vm136, %v135
    %v138 = vld [vmem:[#allocation4] sm:$0xf]
    %v139 = vmul.f32 %v47, %v47
    %vm140 = vcmask 257024
    %v141 = vsel %vm140, %v139, 0.0
    %142 = vadd.xlane.f32.xlu0 %v141
    %v143 = vpop.xlane.xlu0 %142
    %v144 = vadd.f32 %v138, %v143
    %vm145 = vcmask 3072
    %146 = vst.msk [vmem:[#allocation4] sm:$0xf] %vm145, %v144
    // Predicated region
    $region22: #{tpu_custom_call.1} parent=1 // pred_check
      %p147 = pneg %p36
    $region23: #{tpu_custom_call.1} parent=1 // pred_check_branch
      %149 = sbr.rel (%p147) target = $region25
    $region24: #{tpu_custom_call.1} parent=1 // pred_region
      %v150 = vld [vmem:[#allocation3] sm:$0x3]
      %v151 = vld [vmem:[#allocation4] sm:$0xf]
      %vm152 = vcmask 7168
      %v154 = vsel %vm152, %v150, 0
      %v157 = vsel %vm152, %v151, 0
      %159 = vmatprep.subr.mxu0 0.0
      %160 = vmatpush1.xpose.msra.mxu0 0.0
      %161 = vmatprep.subr.mxu0 0.0
      %162 = vmatpush1.xpose.msra.mxu0 0.0
      %163 = vmatprep.subr.mxu0 0.0
      %164 = vmatpush1.xpose.msra.mxu0 0.0
      %165 = vmatprep.subr.mxu0 0.0
      %166 = vmatpush1.xpose.msra.mxu0 0.0
      %167 = vmatprep.subr.mxu0 0.0
      %168 = vmatpush1.xpose.msra.mxu0 0.0
      %169 = vmatprep.subr.mxu0 0.0
      %170 = vmatpush1.xpose.msra.mxu0 0.0
      %171 = vmatprep.subr.mxu0 0.0
      %172 = vmatpush1.xpose.msra.mxu0 0.0
      %173 = vmatprep.subr.mxu0 0.0
      %174 = vmatpush1.xpose.msra.mxu0 0.0
      %175 = vmatprep.subr.mxu0 0.0
      %176 = vmatpush1.xpose.msra.mxu0 0.0
      %177 = vmatprep.subr.mxu0 0.0
      %178 = vmatpush1.xpose.msra.mxu0 0.0
      %179 = vmatprep.subr.mxu0 0.0
      %180 = vmatpush1.xpose.msra.mxu0 0.0
      %181 = vmatprep.subr.mxu0 0.0
      %182 = vmatpush1.xpose.msra.mxu0 0.0
      %183 = vmatprep.subr.mxu0 0.0
      %184 = vmatpush1.xpose.msra.mxu0 0.0
      %185 = vmatprep.subr.mxu0 0.0
      %186 = vmatpush1.xpose.msra.mxu0 0.0
      %187 = vmatprep.subr.mxu0 0.0
      %188 = vmatpush1.xpose.msra.mxu0 0.0
      %189 = vmatprep.subr.mxu0 0.0
      %v190 = vand.u32 %v157, 4294901760
      %191 = vmatpush1.xpose.msra.mxu0 %v190
      %192 = vmatprep.subr.mxu0 0.0
      %193 = vmatpush2.xpose.msra.mxu0 0.0
      %194 = vmatprep.subr.mxu0 0.0
      %195 = vmatpush2.xpose.msra.mxu0 0.0
      %196 = vmatprep.subr.mxu0 0.0
      %197 = vmatpush2.xpose.msra.mxu0 0.0
      %198 = vmatprep.subr.mxu0 0.0
      %199 = vmatpush2.xpose.msra.mxu0 0.0
      %200 = vmatprep.subr.mxu0 0.0
      %201 = vmatpush2.xpose.msra.mxu0 0.0
      %202 = vmatprep.subr.mxu0 0.0
      %203 = vmatpush2.xpose.msra.mxu0 0.0
      %204 = vmatprep.subr.mxu0 0.0
      %205 = vmatpush2.xpose.msra.mxu0 0.0
      %206 = vmatprep.subr.mxu0 0.0
      %207 = vmatpush2.xpose.msra.mxu0 0.0
      %208 = vmatprep.subr.mxu0 0.0
      %209 = vmatpush2.xpose.msra.mxu0 0.0
      %210 = vmatprep.subr.mxu0 0.0
      %211 = vmatpush2.xpose.msra.mxu0 0.0
      %212 = vmatprep.subr.mxu0 0.0
      %213 = vmatpush2.xpose.msra.mxu0 0.0
      %214 = vmatprep.subr.mxu0 0.0
      %215 = vmatpush2.xpose.msra.mxu0 0.0
      %216 = vmatprep.subr.mxu0 0.0
      %217 = vmatpush2.xpose.msra.mxu0 0.0
      %218 = vmatprep.subr.mxu0 0.0
      %219 = vmatpush2.xpose.msra.mxu0 0.0
      %220 = vmatprep.subr.mxu0 0.0
      %221 = vmatpush2.xpose.msra.mxu0 0.0
      %222 = vmatprep.subr.mxu0 0.0
      %223 = vmatpush2.xpose.msra.mxu0 0.0
      %224 = vmatprep.mubr.f32.mxu0 0.0
      %v225 = vand.u32 %v154, 4294901760
      %v226 = vsub.f32 %v154, %v225
      %v227 = vand.u32 %v226, 4294901760
      %v228 = vsub.f32 %v226, %v227
      %v229 = vand.u32 %v228, 4294901760
      %230 = vmatmul.mubr.f32.gmra.mxu0 %v229
      %v231 = vpop.f32.mrf.mxu0
      %v232 = vadd.f32 0.0, %v231
      %v233 = vpop.f32.mrf.mxu0
      %234 = vdwg.mxu0
      %235 = vmatprep.subr.mxu0 0.0
      %236 = vmatpush1.xpose.msra.mxu0 0.0
      %237 = vmatprep.subr.mxu0 0.0
      %238 = vmatpush1.xpose.msra.mxu0 0.0
      %239 = vmatprep.subr.mxu0 0.0
      %240 = vmatpush1.xpose.msra.mxu0 0.0
      %241 = vmatprep.subr.mxu0 0.0
      %242 = vmatpush1.xpose.msra.mxu0 0.0
      %243 = vmatprep.subr.mxu0 0.0
      %244 = vmatpush1.xpose.msra.mxu0 0.0
      %245 = vmatprep.subr.mxu0 0.0
      %246 = vmatpush1.xpose.msra.mxu0 0.0
      %247 = vmatprep.subr.mxu0 0.0
      %248 = vmatpush1.xpose.msra.mxu0 0.0
      %249 = vmatprep.subr.mxu0 0.0
      %250 = vmatpush1.xpose.msra.mxu0 0.0
      %251 = vmatprep.subr.mxu0 0.0
      %252 = vmatpush1.xpose.msra.mxu0 0.0
      %253 = vmatprep.subr.mxu0 0.0
      %254 = vmatpush1.xpose.msra.mxu0 0.0
      %255 = vmatprep.subr.mxu0 0.0
      %256 = vmatpush1.xpose.msra.mxu0 0.0
      %257 = vmatprep.subr.mxu0 0.0
      %258 = vmatpush1.xpose.msra.mxu0 0.0
      %259 = vmatprep.subr.mxu0 0.0
      %260 = vmatpush1.xpose.msra.mxu0 0.0
      %261 = vmatprep.subr.mxu0 0.0
      %262 = vmatpush1.xpose.msra.mxu0 0.0
      %263 = vmatprep.subr.mxu0 0.0
      %264 = vmatpush1.xpose.msra.mxu0 0.0
      %265 = vmatprep.subr.mxu0 0.0
      %v266 = vand.u32 %v157, 4294901760
      %v267 = vsub.f32 %v157, %v266
      %v268 = vand.u32 %v267, 4294901760
      %v269 = vsub.f32 %v267, %v268
      %v270 = vand.u32 %v269, 4294901760
      %271 = vmatpush1.xpose.msra.mxu0 %v270
      %272 = vmatprep.subr.mxu0 0.0
      %273 = vmatpush2.xpose.msra.mxu0 0.0
      %274 = vmatprep.subr.mxu0 0.0
      %275 = vmatpush2.xpose.msra.mxu0 0.0
      %276 = vmatprep.subr.mxu0 0.0
      %277 = vmatpush2.xpose.msra.mxu0 0.0
      %278 = vmatprep.subr.mxu0 0.0
      %279 = vmatpush2.xpose.msra.mxu0 0.0
      %280 = vmatprep.subr.mxu0 0.0
      %281 = vmatpush2.xpose.msra.mxu0 0.0
      %282 = vmatprep.subr.mxu0 0.0
      %283 = vmatpush2.xpose.msra.mxu0 0.0
      %284 = vmatprep.subr.mxu0 0.0
      %285 = vmatpush2.xpose.msra.mxu0 0.0
      %286 = vmatprep.subr.mxu0 0.0
      %287 = vmatpush2.xpose.msra.mxu0 0.0
      %288 = vmatprep.subr.mxu0 0.0
      %289 = vmatpush2.xpose.msra.mxu0 0.0
      %290 = vmatprep.subr.mxu0 0.0
      %291 = vmatpush2.xpose.msra.mxu0 0.0
      %292 = vmatprep.subr.mxu0 0.0
      %293 = vmatpush2.xpose.msra.mxu0 0.0
      %294 = vmatprep.subr.mxu0 0.0
      %295 = vmatpush2.xpose.msra.mxu0 0.0
      %296 = vmatprep.subr.mxu0 0.0
      %297 = vmatpush2.xpose.msra.mxu0 0.0
      %298 = vmatprep.subr.mxu0 0.0
      %299 = vmatpush2.xpose.msra.mxu0 0.0
      %300 = vmatprep.subr.mxu0 0.0
      %301 = vmatpush2.xpose.msra.mxu0 0.0
      %302 = vmatprep.subr.mxu0 0.0
      %303 = vmatpush2.xpose.msra.mxu0 0.0
      %304 = vmatprep.mubr.f32.mxu0 0.0
      %v305 = vand.u32 %v154, 4294901760
      %306 = vmatmul.mubr.f32.gmra.mxu0 %v305
      %v307 = vpop.f32.mrf.mxu0
      %v308 = vadd.f32 %v232, %v307
      %v309 = vpop.f32.mrf.mxu0
      %310 = vdwg.mxu0
      %311 = vmatprep.subr.mxu0 0.0
      %312 = vmatpush1.xpose.msra.mxu0 0.0
      %313 = vmatprep.subr.mxu0 0.0
      %314 = vmatpush1.xpose.msra.mxu0 0.0
      %315 = vmatprep.subr.mxu0 0.0
      %316 = vmatpush1.xpose.msra.mxu0 0.0
      %317 = vmatprep.subr.mxu0 0.0
      %318 = vmatpush1.xpose.msra.mxu0 0.0
      %319 = vmatprep.subr.mxu0 0.0
      %320 = vmatpush1.xpose.msra.mxu0 0.0
      %321 = vmatprep.subr.mxu0 0.0
      %322 = vmatpush1.xpose.msra.mxu0 0.0
      %323 = vmatprep.subr.mxu0 0.0
      %324 = vmatpush1.xpose.msra.mxu0 0.0
      %325 = vmatprep.subr.mxu0 0.0
      %326 = vmatpush1.xpose.msra.mxu0 0.0
      %327 = vmatprep.subr.mxu0 0.0
      %328 = vmatpush1.xpose.msra.mxu0 0.0
      %329 = vmatprep.subr.mxu0 0.0
      %330 = vmatpush1.xpose.msra.mxu0 0.0
      %331 = vmatprep.subr.mxu0 0.0
      %332 = vmatpush1.xpose.msra.mxu0 0.0
      %333 = vmatprep.subr.mxu0 0.0
      %334 = vmatpush1.xpose.msra.mxu0 0.0
      %335 = vmatprep.subr.mxu0 0.0
      %336 = vmatpush1.xpose.msra.mxu0 0.0
      %337 = vmatprep.subr.mxu0 0.0
      %338 = vmatpush1.xpose.msra.mxu0 0.0
      %339 = vmatprep.subr.mxu0 0.0
      %340 = vmatpush1.xpose.msra.mxu0 0.0
      %341 = vmatprep.subr.mxu0 0.0
      %v342 = vand.u32 %v157, 4294901760
      %v343 = vsub.f32 %v157, %v342
      %344 = vmatpush1.xpose.msra.mxu0 %v343
      %345 = vmatprep.subr.mxu0 0.0
      %346 = vmatpush2.xpose.msra.mxu0 0.0
      %347 = vmatprep.subr.mxu0 0.0
      %348 = vmatpush2.xpose.msra.mxu0 0.0
      %349 = vmatprep.subr.mxu0 0.0
      %350 = vmatpush2.xpose.msra.mxu0 0.0
      %351 = vmatprep.subr.mxu0 0.0
      %352 = vmatpush2.xpose.msra.mxu0 0.0
      %353 = vmatprep.subr.mxu0 0.0
      %354 = vmatpush2.xpose.msra.mxu0 0.0
      %355 = vmatprep.subr.mxu0 0.0
      %356 = vmatpush2.xpose.msra.mxu0 0.0
      %357 = vmatprep.subr.mxu0 0.0
      %358 = vmatpush2.xpose.msra.mxu0 0.0
      %359 = vmatprep.subr.mxu0 0.0
      %360 = vmatpush2.xpose.msra.mxu0 0.0
      %361 = vmatprep.subr.mxu0 0.0
      %362 = vmatpush2.xpose.msra.mxu0 0.0
      %363 = vmatprep.subr.mxu0 0.0
      %364 = vmatpush2.xpose.msra.mxu0 0.0
      %365 = vmatprep.subr.mxu0 0.0
      %366 = vmatpush2.xpose.msra.mxu0 0.0
      %367 = vmatprep.subr.mxu0 0.0
      %368 = vmatpush2.xpose.msra.mxu0 0.0
      %369 = vmatprep.subr.mxu0 0.0
      %370 = vmatpush2.xpose.msra.mxu0 0.0
      %371 = vmatprep.subr.mxu0 0.0
      %372 = vmatpush2.xpose.msra.mxu0 0.0
      %373 = vmatprep.subr.mxu0 0.0
      %374 = vmatpush2.xpose.msra.mxu0 0.0
      %375 = vmatprep.subr.mxu0 0.0
      %376 = vmatpush2.xpose.msra.mxu0 0.0
      %377 = vmatprep.mubr.f32.mxu0 0.0
      %v378 = vand.u32 %v154, 4294901760
      %v379 = vsub.f32 %v154, %v378
      %380 = vmatmul.mubr.f32.gmra.mxu0 %v379
      %v381 = vpop.f32.mrf.mxu0
      %v382 = vadd.f32 %v308, %v381
      %v383 = vpop.f32.mrf.mxu0
      %384 = vdwg.mxu0
      %385 = vmatprep.subr.mxu0 0.0
      %386 = vmatpush1.xpose.msra.mxu0 0.0
      %387 = vmatprep.subr.mxu0 0.0
      %388 = vmatpush1.xpose.msra.mxu0 0.0
      %389 = vmatprep.subr.mxu0 0.0
      %390 = vmatpush1.xpose.msra.mxu0 0.0
      %391 = vmatprep.subr.mxu0 0.0
      %392 = vmatpush1.xpose.msra.mxu0 0.0
      %393 = vmatprep.subr.mxu0 0.0
      %394 = vmatpush1.xpose.msra.mxu0 0.0
      %395 = vmatprep.subr.mxu0 0.0
      %396 = vmatpush1.xpose.msra.mxu0 0.0
      %397 = vmatprep.subr.mxu0 0.0
      %398 = vmatpush1.xpose.msra.mxu0 0.0
      %399 = vmatprep.subr.mxu0 0.0
      %400 = vmatpush1.xpose.msra.mxu0 0.0
      %401 = vmatprep.subr.mxu0 0.0
      %402 = vmatpush1.xpose.msra.mxu0 0.0
      %403 = vmatprep.subr.mxu0 0.0
      %404 = vmatpush1.xpose.msra.mxu0 0.0
      %405 = vmatprep.subr.mxu0 0.0
      %406 = vmatpush1.xpose.msra.mxu0 0.0
      %407 = vmatprep.subr.mxu0 0.0
      %408 = vmatpush1.xpose.msra.mxu0 0.0
      %409 = vmatprep.subr.mxu0 0.0
      %410 = vmatpush1.xpose.msra.mxu0 0.0
      %411 = vmatprep.subr.mxu0 0.0
      %412 = vmatpush1.xpose.msra.mxu0 0.0
      %413 = vmatprep.subr.mxu0 0.0
      %414 = vmatpush1.xpose.msra.mxu0 0.0
      %415 = vmatprep.subr.mxu0 0.0
      %v416 = vand.u32 %v157, 4294901760
      %417 = vmatpush1.xpose.msra.mxu0 %v416
      %418 = vmatprep.subr.mxu0 0.0
      %419 = vmatpush2.xpose.msra.mxu0 0.0
      %420 = vmatprep.subr.mxu0 0.0
      %421 = vmatpush2.xpose.msra.mxu0 0.0
      %422 = vmatprep.subr.mxu0 0.0
      %423 = vmatpush2.xpose.msra.mxu0 0.0
      %424 = vmatprep.subr.mxu0 0.0
      %425 = vmatpush2.xpose.msra.mxu0 0.0
      %426 = vmatprep.subr.mxu0 0.0
      %427 = vmatpush2.xpose.msra.mxu0 0.0
      %428 = vmatprep.subr.mxu0 0.0
      %429 = vmatpush2.xpose.msra.mxu0 0.0
      %430 = vmatprep.subr.mxu0 0.0
      %431 = vmatpush2.xpose.msra.mxu0 0.0
      %432 = vmatprep.subr.mxu0 0.0
      %433 = vmatpush2.xpose.msra.mxu0 0.0
      %434 = vmatprep.subr.mxu0 0.0
      %435 = vmatpush2.xpose.msra.mxu0 0.0
      %436 = vmatprep.subr.mxu0 0.0
      %437 = vmatpush2.xpose.msra.mxu0 0.0
      %438 = vmatprep.subr.mxu0 0.0
      %439 = vmatpush2.xpose.msra.mxu0 0.0
      %440 = vmatprep.subr.mxu0 0.0
      %441 = vmatpush2.xpose.msra.mxu0 0.0
      %442 = vmatprep.subr.mxu0 0.0
      %443 = vmatpush2.xpose.msra.mxu0 0.0
      %444 = vmatprep.subr.mxu0 0.0
      %445 = vmatpush2.xpose.msra.mxu0 0.0
      %446 = vmatprep.subr.mxu0 0.0
      %447 = vmatpush2.xpose.msra.mxu0 0.0
      %448 = vmatprep.subr.mxu0 0.0
      %449 = vmatpush2.xpose.msra.mxu0 0.0
      %450 = vmatprep.mubr.f32.mxu0 0.0
      %v451 = vand.u32 %v154, 4294901760
      %v452 = vsub.f32 %v154, %v451
      %v453 = vand.u32 %v452, 4294901760
      %454 = vmatmul.mubr.f32.gmra.mxu0 %v453
      %v455 = vpop.f32.mrf.mxu0
      %v456 = vadd.f32 %v382, %v455
      %v457 = vpop.f32.mrf.mxu0
      %458 = vdwg.mxu0
      %459 = vmatprep.subr.mxu0 0.0
      %460 = vmatpush1.xpose.msra.mxu0 0.0
      %461 = vmatprep.subr.mxu0 0.0
      %462 = vmatpush1.xpose.msra.mxu0 0.0
      %463 = vmatprep.subr.mxu0 0.0
      %464 = vmatpush1.xpose.msra.mxu0 0.0
      %465 = vmatprep.subr.mxu0 0.0
      %466 = vmatpush1.xpose.msra.mxu0 0.0
      %467 = vmatprep.subr.mxu0 0.0
      %468 = vmatpush1.xpose.msra.mxu0 0.0
      %469 = vmatprep.subr.mxu0 0.0
      %470 = vmatpush1.xpose.msra.mxu0 0.0
      %471 = vmatprep.subr.mxu0 0.0
      %472 = vmatpush1.xpose.msra.mxu0 0.0
      %473 = vmatprep.subr.mxu0 0.0
      %474 = vmatpush1.xpose.msra.mxu0 0.0
      %475 = vmatprep.subr.mxu0 0.0
      %476 = vmatpush1.xpose.msra.mxu0 0.0
      %477 = vmatprep.subr.mxu0 0.0
      %478 = vmatpush1.xpose.msra.mxu0 0.0
      %479 = vmatprep.subr.mxu0 0.0
      %480 = vmatpush1.xpose.msra.mxu0 0.0
      %481 = vmatprep.subr.mxu0 0.0
      %482 = vmatpush1.xpose.msra.mxu0 0.0
      %483 = vmatprep.subr.mxu0 0.0
      %484 = vmatpush1.xpose.msra.mxu0 0.0
      %485 = vmatprep.subr.mxu0 0.0
      %486 = vmatpush1.xpose.msra.mxu0 0.0
      %487 = vmatprep.subr.mxu0 0.0
      %488 = vmatpush1.xpose.msra.mxu0 0.0
      %489 = vmatprep.subr.mxu0 0.0
      %v490 = vand.u32 %v157, 4294901760
      %v491 = vsub.f32 %v157, %v490
      %v492 = vand.u32 %v491, 4294901760
      %493 = vmatpush1.xpose.msra.mxu0 %v492
      %494 = vmatprep.subr.mxu0 0.0
      %495 = vmatpush2.xpose.msra.mxu0 0.0
      %496 = vmatprep.subr.mxu0 0.0
      %497 = vmatpush2.xpose.msra.mxu0 0.0
      %498 = vmatprep.subr.mxu0 0.0
      %499 = vmatpush2.xpose.msra.mxu0 0.0
      %500 = vmatprep.subr.mxu0 0.0
      %501 = vmatpush2.xpose.msra.mxu0 0.0
      %502 = vmatprep.subr.mxu0 0.0
      %503 = vmatpush2.xpose.msra.mxu0 0.0
      %504 = vmatprep.subr.mxu0 0.0
      %505 = vmatpush2.xpose.msra.mxu0 0.0
      %506 = vmatprep.subr.mxu0 0.0
      %507 = vmatpush2.xpose.msra.mxu0 0.0
      %508 = vmatprep.subr.mxu0 0.0
      %509 = vmatpush2.xpose.msra.mxu0 0.0
      %510 = vmatprep.subr.mxu0 0.0
      %511 = vmatpush2.xpose.msra.mxu0 0.0
      %512 = vmatprep.subr.mxu0 0.0
      %513 = vmatpush2.xpose.msra.mxu0 0.0
      %514 = vmatprep.subr.mxu0 0.0
      %515 = vmatpush2.xpose.msra.mxu0 0.0
      %516 = vmatprep.subr.mxu0 0.0
      %517 = vmatpush2.xpose.msra.mxu0 0.0
      %518 = vmatprep.subr.mxu0 0.0
      %519 = vmatpush2.xpose.msra.mxu0 0.0
      %520 = vmatprep.subr.mxu0 0.0
      %521 = vmatpush2.xpose.msra.mxu0 0.0
      %522 = vmatprep.subr.mxu0 0.0
      %523 = vmatpush2.xpose.msra.mxu0 0.0
      %524 = vmatprep.subr.mxu0 0.0
      %525 = vmatpush2.xpose.msra.mxu0 0.0
      %526 = vmatprep.mubr.f32.mxu0 0.0
      %v527 = vand.u32 %v154, 4294901760
      %528 = vmatmul.mubr.f32.gmra.mxu0 %v527
      %v529 = vpop.f32.mrf.mxu0
      %v530 = vadd.f32 %v456, %v529
      %v531 = vpop.f32.mrf.mxu0
      %532 = vdwg.mxu0
      %533 = vmatprep.subr.mxu0 0.0
      %534 = vmatpush1.xpose.msra.mxu0 0.0
      %535 = vmatprep.subr.mxu0 0.0
      %536 = vmatpush1.xpose.msra.mxu0 0.0
      %537 = vmatprep.subr.mxu0 0.0
      %538 = vmatpush1.xpose.msra.mxu0 0.0
      %539 = vmatprep.subr.mxu0 0.0
      %540 = vmatpush1.xpose.msra.mxu0 0.0
      %541 = vmatprep.subr.mxu0 0.0
      %542 = vmatpush1.xpose.msra.mxu0 0.0
      %543 = vmatprep.subr.mxu0 0.0
      %544 = vmatpush1.xpose.msra.mxu0 0.0
      %545 = vmatprep.subr.mxu0 0.0
      %546 = vmatpush1.xpose.msra.mxu0 0.0
      %547 = vmatprep.subr.mxu0 0.0
      %548 = vmatpush1.xpose.msra.mxu0 0.0
      %549 = vmatprep.subr.mxu0 0.0
      %550 = vmatpush1.xpose.msra.mxu0 0.0
      %551 = vmatprep.subr.mxu0 0.0
      %552 = vmatpush1.xpose.msra.mxu0 0.0
      %553 = vmatprep.subr.mxu0 0.0
      %554 = vmatpush1.xpose.msra.mxu0 0.0
      %555 = vmatprep.subr.mxu0 0.0
      %556 = vmatpush1.xpose.msra.mxu0 0.0
      %557 = vmatprep.subr.mxu0 0.0
      %558 = vmatpush1.xpose.msra.mxu0 0.0
      %559 = vmatprep.subr.mxu0 0.0
      %560 = vmatpush1.xpose.msra.mxu0 0.0
      %561 = vmatprep.subr.mxu0 0.0
      %562 = vmatpush1.xpose.msra.mxu0 0.0
      %563 = vmatprep.subr.mxu0 0.0
      %v564 = vand.u32 %v157, 4294901760
      %565 = vmatpush1.xpose.msra.mxu0 %v564
      %566 = vmatprep.subr.mxu0 0.0
      %567 = vmatpush2.xpose.msra.mxu0 0.0
      %568 = vmatprep.subr.mxu0 0.0
      %569 = vmatpush2.xpose.msra.mxu0 0.0
      %570 = vmatprep.subr.mxu0 0.0
      %571 = vmatpush2.xpose.msra.mxu0 0.0
      %572 = vmatprep.subr.mxu0 0.0
      %573 = vmatpush2.xpose.msra.mxu0 0.0
      %574 = vmatprep.subr.mxu0 0.0
      %575 = vmatpush2.xpose.msra.mxu0 0.0
      %576 = vmatprep.subr.mxu0 0.0
      %577 = vmatpush2.xpose.msra.mxu0 0.0
      %578 = vmatprep.subr.mxu0 0.0
      %579 = vmatpush2.xpose.msra.mxu0 0.0
      %580 = vmatprep.subr.mxu0 0.0
      %581 = vmatpush2.xpose.msra.mxu0 0.0
      %582 = vmatprep.subr.mxu0 0.0
      %583 = vmatpush2.xpose.msra.mxu0 0.0
      %584 = vmatprep.subr.mxu0 0.0
      %585 = vmatpush2.xpose.msra.mxu0 0.0
      %586 = vmatprep.subr.mxu0 0.0
      %587 = vmatpush2.xpose.msra.mxu0 0.0
      %588 = vmatprep.subr.mxu0 0.0
      %589 = vmatpush2.xpose.msra.mxu0 0.0
      %590 = vmatprep.subr.mxu0 0.0
      %591 = vmatpush2.xpose.msra.mxu0 0.0
      %592 = vmatprep.subr.mxu0 0.0
      %593 = vmatpush2.xpose.msra.mxu0 0.0
      %594 = vmatprep.subr.mxu0 0.0
      %595 = vmatpush2.xpose.msra.mxu0 0.0
      %596 = vmatprep.subr.mxu0 0.0
      %597 = vmatpush2.xpose.msra.mxu0 0.0
      %598 = vmatprep.mubr.f32.mxu0 0.0
      %v599 = vand.u32 %v154, 4294901760
      %600 = vmatmul.mubr.f32.gmra.mxu0 %v599
      %v601 = vpop.f32.mrf.mxu0
      %v602 = vadd.f32 %v530, %v601
      %v603 = vpop.f32.mrf.mxu0
      %604 = vdwg.mxu0
      %v605 = vmax.f32 %v602, 1e-16
      %v606 = vld [vmem:[#allocation2] sm:$0x3]
      %v607 = vrsqrt.pop %v605
      %v608 = vmul.f32 %v606, %v607
      %v609 = vmul.f32 %v608, 14.285714
      %610 = vst.msk [vmem:[#allocation10] sm:$0x3] %vm127, %v609
    $region25: #{tpu_custom_call.1} parent=1 // pred_fallthru
      _
    // Predicated region
    $region26: #{tpu_custom_call.1} parent=1 // pred_check
      _
    $region27: #{tpu_custom_call.1} parent=1 // pred_check_branch
      %612 = sbr.rel (0) target = $region29
    $region28: #{tpu_custom_call.1} parent=1 // pred_region
      %s614 = ssub.s32 32, 32
      %615 = vsyncadd [#allocation7], %s614
      %s617 = sshll.u32 [#allocation10], 4
      %s618 = int_to_ptr.vmem [resolvable:$true] %s617
      %620 = dma.vmem_to_hbm [thread:$0]  %s618, 32, %s2, [#allocation7]
    $region29: #{tpu_custom_call.1} parent=1 // pred_fallthru
      _
    // Predicated region
    $region30: #{tpu_custom_call.1} parent=1 // pred_check
      _
    $region31: #{tpu_custom_call.1} parent=1 // pred_check_branch
      %622 = sbr.rel (0) target = $region33
    $region32: #{tpu_custom_call.1} parent=1 // pred_region
      %623 = dma.done [#allocation7], 32
    $region33: #{tpu_custom_call.1} parent=1 // pred_fallthru
      _
    %624 = vsyncpa [#allocation6], 1
    %625 = vsyncpa [#allocation9], 1
    %626 = vsyncpa [#allocation7], 1

</llo_original>
